<compile_context>
chip_gen: v7x
topology: tpu7x:2x2x1
jax: 0.10.0
libtpu: 0.0.40
codegen_flags: <defaults>
</compile_context>

<pallas_src>
import jax
import jax.numpy as jnp
from jax.experimental import pallas as pl
from jax.experimental.pallas import tpu as pltpu


def _round_up(x, m):
    return ((x + m - 1) // m) * m


def _make_kernel(Dp, compute_dtype):
    """Kernel with static padded hidden dim Dp and MXU operand dtype."""

    def kernel(x_ref, wab_ref, bab_ref, wc_ref, bc_ref, A_ref):
        # x arrives as f32 straight from HBM (no wrapper pad/cast pass); the
        # cast to the MXU operand dtype is a cheap VPU op hidden under the
        # matmul.  No-op when compute_dtype is f32.
        x = x_ref[...].astype(compute_dtype)                     # (T, L)

        # Fused attention_a | attention_b: ONE MXU pass over (L, 2*Dp),
        # f32 accumulation; bias add + activations in f32.
        h = jnp.dot(x, wab_ref[...],
                    preferred_element_type=jnp.float32) + bab_ref[...]
        a = jnp.tanh(h[:, :Dp])                                   # tanh half
        b = jax.nn.sigmoid(h[:, Dp:])                             # sigmoid half
        ab = a * b                                                # (T, Dp) f32; pad cols are 0

        # attention_c: tiny MXU matmul, kept in f32 for head-precision parity
        # across compute dtypes (MXU has enormous slack here).
        A = jnp.dot(ab, wc_ref[...],
                    preferred_element_type=jnp.float32) + bc_ref[...]
        A_ref[...] = A.astype(A_ref.dtype)

    return kernel


def prepare_attn_gated_params(wa, ba, wb, bb, wc, bc, *,
                              compute_dtype=jnp.bfloat16):
    """One-time weight prep (hoist out of the per-call path).

    wa: (L, D), ba: (D,)   -- attention_a Linear (weights stored transposed)
    wb: (L, D), bb: (D,)   -- attention_b Linear
    wc: (D, C), bc: (C,)   -- attention_c Linear

    Fuses Wa|Wb into one (L, 2*Dp) MXU operand with the hidden dim padded to
    Dp = round_up(D, 128) so both halves start on a 128-lane boundary.  Pad
    columns have zero weight/bias: tanh(0)*sigmoid(0) = 0, and the matching
    rows of the padded Wc are zero, so results are exact.
    """
    L, D = wa.shape
    C = wc.shape[1]
    if compute_dtype is None:
        compute_dtype = wa.dtype
    Dp = _round_up(D, 128)

    wab = jnp.zeros((L, 2 * Dp), dtype=compute_dtype)
    wab = wab.at[:, :D].set(wa.astype(compute_dtype))
    wab = wab.at[:, Dp:Dp + D].set(wb.astype(compute_dtype))

    bab = jnp.zeros((1, 2 * Dp), dtype=jnp.float32)
    bab = bab.at[0, :D].set(ba.astype(jnp.float32))
    bab = bab.at[0, Dp:Dp + D].set(bb.astype(jnp.float32))

    wc_p = jnp.zeros((Dp, C), dtype=jnp.float32)
    wc_p = wc_p.at[:D, :].set(wc.astype(jnp.float32))
    bc_row = bc.reshape(1, C).astype(jnp.float32)

    return {"wab": wab, "bab": bab, "wc": wc_p, "bc": bc_row}


def attn_net_gated_prepared(x, params, *, row_tile=1024):
    """Gated attention head with pre-fused weights. Returns (A, x)."""
    N, L = x.shape
    wab, bab, wc_p, bc_row = params["wab"], params["bab"], params["wc"], params["bc"]
    assert wab.shape[0] == L
    Dp = wab.shape[1] // 2
    C = wc_p.shape[1]
    compute_dtype = wab.dtype
    out_dtype = x.dtype

    # Row tile: multiple of 8 (sublane); capped so the 1-D parallel grid has
    # >= 2 blocks whenever N can be split (keeps both v7x TCs busy). Pallas
    # masks the ragged last block's output writes, so no wrapper-side padding.
    tile = max(8, min(int(row_tile), _round_up(pl.cdiv(N, 2), 8)))
    tile = _round_up(tile, 8)
    grid = pl.cdiv(N, tile)

    kernel = _make_kernel(Dp, compute_dtype)

    A = pl.pallas_call(
        kernel,
        out_shape=jax.ShapeDtypeStruct((N, C), out_dtype),
        grid_spec=pltpu.PrefetchScalarGridSpec(
            num_scalar_prefetch=0,
            grid=(grid,),
            in_specs=[
                pl.BlockSpec((tile, L), lambda i: (i, 0)),       # x rows (f32)
                pl.BlockSpec((L, 2 * Dp), lambda i: (0, 0)),     # Wa|Wb fused
                pl.BlockSpec((1, 2 * Dp), lambda i: (0, 0)),     # ba|bb
                pl.BlockSpec((Dp, C), lambda i: (0, 0)),         # Wc (f32)
                pl.BlockSpec((1, C), lambda i: (0, 0)),          # bc
            ],
            out_specs=pl.BlockSpec((tile, C), lambda i: (i, 0)),
        ),
        compiler_params=pltpu.CompilerParams(
            dimension_semantics=("parallel",),
            vmem_limit_bytes=32 * 1024 * 1024,
        ),
    )(x, wab, bab, wc_p, bc_row)

    return A, x


def attn_net_gated(x, wa, ba, wb, bb, wc, bc, *, row_tile=1024,
                   compute_dtype=jnp.bfloat16):
    """Convenience one-shot wrapper (prep + call). Prefer preparing once."""
    params = prepare_attn_gated_params(wa, ba, wb, bb, wc, bc,
                                       compute_dtype=compute_dtype)
    return attn_net_gated_prepared(x, params, row_tile=row_tile)


def _reference(x, wa, ba, wb, bb, wc, bc):
    a = jnp.tanh(x @ wa + ba)
    b = jax.nn.sigmoid(x @ wb + bb)
    return (a * b) @ wc + bc


if __name__ == "__main__":
    # Small shapes consistent with the module: N instances (ragged, not a
    # multiple of 8), L input features, D hidden, n_classes=1.
    N, L, D, C = 50, 32, 16, 1

    key = jax.random.PRNGKey(0)
    kx, kwa, kba, kwb, kbb, kwc, kbc = jax.random.split(key, 7)

    x = jax.random.normal(kx, (N, L), dtype=jnp.float32)
    # Deterministic synthetic parameters (Linear weights stored transposed).
    wa = jax.random.normal(kwa, (L, D), dtype=jnp.float32) * 0.1
    ba = jax.random.normal(kba, (D,), dtype=jnp.float32) * 0.1
    wb = jax.random.normal(kwb, (L, D), dtype=jnp.float32) * 0.1
    bb = jax.random.normal(kbb, (D,), dtype=jnp.float32) * 0.1
    wc = jax.random.normal(kwc, (D, C), dtype=jnp.float32) * 0.1
    bc = jax.random.normal(kbc, (C,), dtype=jnp.float32) * 0.1

    A_ref = _reference(x, wa, ba, wb, bb, wc, bc)

    # Exact f32 path (tight tolerance). Weight prep hoisted out of the call.
    params_f32 = prepare_attn_gated_params(wa, ba, wb, bb, wc, bc,
                                           compute_dtype=jnp.float32)
    A32, x_out = attn_net_gated_prepared(x, params_f32)
    jax.block_until_ready((A32, x_out))
    assert A32.shape == (N, C)
    assert x_out.shape == (N, L)
    assert jnp.allclose(A32, A_ref, atol=1e-5, rtol=1e-5)
    assert jnp.array_equal(x_out, x)

    # Default bf16-MXU-operand path (f32 accumulate / f32 head) -> relaxed tol.
    params_bf16 = prepare_attn_gated_params(wa, ba, wb, bb, wc, bc)
    A16, x_out16 = attn_net_gated_prepared(x, params_bf16)
    jax.block_until_ready((A16, x_out16))
    assert A16.shape == (N, C)
    assert jnp.allclose(A16, A_ref, atol=3e-2, rtol=3e-2)
    assert jnp.array_equal(x_out16, x)

    print("KERNEL_OK")
</pallas_src>

<mosaic_0001>
module attributes {stable_mosaic.version = 11 : i64} {
  func.func @kernel(%arg0: i32, %arg1: memref<32x32xf32, #tpu.memory_space<vmem>>, %arg2: memref<32x256xf32, #tpu.memory_space<vmem>>, %arg3: memref<1x256xf32, #tpu.memory_space<vmem>>, %arg4: memref<128x1xf32, #tpu.memory_space<vmem>>, %arg5: memref<1x1xf32, #tpu.memory_space<vmem>>, %arg6: memref<32x1xf32, #tpu.memory_space<vmem>>) attributes {dimension_semantics = [#tpu.dimension_semantics<parallel>], iteration_bounds = array<i64: 2>, scalar_prefetch = 0 : i64, scratch_operands = 0 : i64, tpu.core_type = #tpu.core_type<tc>, window_params = [{transform_indices = @transform_0, window_bounds = array<i64: 32, 32>}, {pipeline_mode = #tpu.pipeline_mode<synchronous>, transform_indices = @transform_1, window_bounds = array<i64: 32, 256>}, {pipeline_mode = #tpu.pipeline_mode<synchronous>, transform_indices = @transform_2, window_bounds = array<i64: 1, 256>}, {pipeline_mode = #tpu.pipeline_mode<synchronous>, transform_indices = @transform_3, window_bounds = array<i64: 128, 1>}, {pipeline_mode = #tpu.pipeline_mode<synchronous>, transform_indices = @transform_4, window_bounds = array<i64: 1, 1>}, {transform_indices = @transform_5, window_bounds = array<i64: 32, 1>}]} {
    %c0 = arith.constant 0 : index
    %c0_0 = arith.constant 0 : index
    %0 = vector.load %arg1[%c0, %c0_0] : memref<32x32xf32, #tpu.memory_space<vmem>>, vector<32x32xf32>
    %c0_1 = arith.constant 0 : index
    %c0_2 = arith.constant 0 : index
    %1 = vector.load %arg2[%c0_1, %c0_2] : memref<32x256xf32, #tpu.memory_space<vmem>>, vector<32x256xf32>
    %cst = arith.constant dense<0.000000e+00> : vector<32x256xf32>
    %2 = tpu.matmul %0, %1, %cst {dimension_numbers = #tpu.dot_dimension_numbers<[1], [0], [0], [1], [0, 0, 1, 1], [], []>} : vector<32x32xf32>, vector<32x256xf32>, vector<32x256xf32> -> vector<32x256xf32>
    %c0_3 = arith.constant 0 : index
    %c0_4 = arith.constant 0 : index
    %3 = vector.load %arg3[%c0_3, %c0_4] : memref<1x256xf32, #tpu.memory_space<vmem>>, vector<1x256xf32>
    %4 = vector.broadcast %3 : vector<1x256xf32> to vector<32x256xf32>
    %5 = arith.addf %2, %4 : vector<32x256xf32>
    %6 = vector.extract_strided_slice %5 {offsets = [0, 0], sizes = [32, 128], strides = [1, 1]} : vector<32x256xf32> to vector<32x128xf32>
    %7 = math.tanh %6 : vector<32x128xf32>
    %8 = vector.extract_strided_slice %5 {offsets = [0, 128], sizes = [32, 128], strides = [1, 1]} : vector<32x256xf32> to vector<32x128xf32>
    %9 = arith.negf %8 : vector<32x128xf32>
    %10 = math.exp %9 : vector<32x128xf32>
    %cst_5 = arith.constant 1.000000e+00 : f32
    %11 = vector.broadcast %cst_5 : f32 to vector<32x128xf32>
    %12 = arith.addf %11, %10 : vector<32x128xf32>
    %13 = arith.divf %11, %12 : vector<32x128xf32>
    %14 = arith.mulf %7, %13 : vector<32x128xf32>
    %c0_6 = arith.constant 0 : index
    %c0_7 = arith.constant 0 : index
    %15 = vector.load %arg4[%c0_6, %c0_7] : memref<128x1xf32, #tpu.memory_space<vmem>>, vector<128x1xf32>
    %cst_8 = arith.constant dense<0.000000e+00> : vector<32x1xf32>
    %16 = tpu.matmul %14, %15, %cst_8 {dimension_numbers = #tpu.dot_dimension_numbers<[1], [0], [0], [1], [0, 0, 1, 1], [], []>} : vector<32x128xf32>, vector<128x1xf32>, vector<32x1xf32> -> vector<32x1xf32>
    %c0_9 = arith.constant 0 : index
    %c0_10 = arith.constant 0 : index
    %17 = vector.load %arg5[%c0_9, %c0_10] : memref<1x1xf32, #tpu.memory_space<vmem>>, vector<1x1xf32>
    %18 = vector.broadcast %17 : vector<1x1xf32> to vector<32x1xf32>
    %19 = arith.addf %16, %18 : vector<32x1xf32>
    %c0_11 = arith.constant 0 : index
    %c0_12 = arith.constant 0 : index
    %20 = vector.load %arg6[%c0_11, %c0_12] : memref<32x1xf32, #tpu.memory_space<vmem>>, vector<32x1xf32>
    tpu.vector_store %arg6[%c0_11, %c0_12], %19 {strides = array<i32>} : memref<32x1xf32, #tpu.memory_space<vmem>>, vector<32x1xf32>,
    return
  }
  func.func @transform_0(%arg0: i32) -> (i32, i32) {
    %c0_i32 = arith.constant 0 : i32
    %c0_i32_0 = arith.constant 0 : i32
    return %arg0, %c0_i32 : i32, i32
  }
  func.func @transform_1(%arg0: i32) -> (i32, i32) {
    %c0_i32 = arith.constant 0 : i32
    %c0_i32_0 = arith.constant 0 : i32
    %c0_i32_1 = arith.constant 0 : i32
    return %c0_i32, %c0_i32_0 : i32, i32
  }
  func.func @transform_2(%arg0: i32) -> (i32, i32) {
    %c0_i32 = arith.constant 0 : i32
    %c0_i32_0 = arith.constant 0 : i32
    %c0_i32_1 = arith.constant 0 : i32
    return %c0_i32, %c0_i32_0 : i32, i32
  }
  func.func @transform_3(%arg0: i32) -> (i32, i32) {
    %c0_i32 = arith.constant 0 : i32
    %c0_i32_0 = arith.constant 0 : i32
    %c0_i32_1 = arith.constant 0 : i32
    return %c0_i32, %c0_i32_0 : i32, i32
  }
  func.func @transform_4(%arg0: i32) -> (i32, i32) {
    %c0_i32 = arith.constant 0 : i32
    %c0_i32_0 = arith.constant 0 : i32
    %c0_i32_1 = arith.constant 0 : i32
    return %c0_i32, %c0_i32_0 : i32, i32
  }
  func.func @transform_5(%arg0: i32) -> (i32, i32) {
    %c0_i32 = arith.constant 0 : i32
    %c0_i32_0 = arith.constant 0 : i32
    return %arg0, %c0_i32 : i32, i32
  }
}

</mosaic_0001>

<llo_original>
// kernel: tpu_custom_call.1
$region0: #{tpu_custom_call.1}
  #allocation0 [shape = 'u32[]', space=smem, size = 0x4, offset = 0x4, fixed_abs, tag = 'smem constant byte address 0x4 - core index']
  #allocation1 [shape = 'u32[144,128]{1,0:T(1,128)}', space=vmem, size = 0x12000, scoped, tag = 'internal scratch']
  #allocation2 [shape = 'f32[1,1]{1,0:T(1,128)S(1)}', space=vmem, size = 0x200, scoped, tag = 'scoped memory for tpu_custom_call.1']
  %s0 = inlined_call_operand.vmem [shape: f32[50,32], index: 0, kind: input, shape index: {}]
  %s1 = inlined_call_operand.vmem [shape: f32[32,256], index: 1, kind: input, shape index: {}]
  %s2 = inlined_call_operand.vmem [shape: f32[1,256], index: 2, kind: input, shape index: {}]
  %s3 = inlined_call_operand.vmem [shape: f32[128,1], index: 3, kind: input, shape index: {}]
  %s4 = inlined_call_operand.<no memory space> [shape: f32[1,1], index: 4, kind: input, shape index: {}]
  %s5 = inlined_call_operand.vmem [shape: f32[50,1], index: 5, kind: output, shape index: {}]
  %s6 = sld [smem:[#allocation0]]
  $region101: #{tpu_custom_call.1} parent=0
    _
  %s8 = ssub.s32 1, %s6
  %s9 = scalar_select 0, %s8, %s6
  %v10 = vstv %s4
  %11 = vst [vmem:[#allocation2] sm:$0x1] %v10
  $region1: #{tpu_custom_call.1} parent=0
    #allocation3 [shape = 'u8[32768]{0}', space=vmem, size = 0x8000, scoped, tag = 'output window, operand 0']
    loop: start=0, step=1, limit=4
    $region2: #{tpu_custom_call.1} parent=1 // loop_pre_header
      _
    $region3: #{tpu_custom_call.1} parent=1 // loop_header
      %s13 = sphi 0, %s17
      %p14 = scmp.ge.s32.totalorder %s13, 4
      %s23 = sphi 0, %s25
      %s26 = sphi 0, %s23
      %s27 = sphi 0, %s26
      %s43 = sphi 0, %s27
      %s47 = sphi 0, %s47
      %s49 = sphi 0, %s47
      %s50 = sphi 0, %s49
      %s64 = sphi 0, %s50
      %s68 = sphi 0, %s68
      %s70 = sphi 0, %s68
      %s71 = sphi 0, %s70
      %s85 = sphi 0, %s71
      %s89 = sphi 0, %s89
      %s91 = sphi 0, %s89
      %s92 = sphi 0, %s91
      %s106 = sphi 0, %s92
      %s110 = sphi 0, %s110
      %s112 = sphi 0, %s110
      %s113 = sphi 0, %s112
      %s127 = sphi 0, %s113
      %s133 = sphi 0, %s135
      %s136 = sphi 0, %s133
      %s137 = sphi 0, %s136
      %s153 = sphi 0, %s137
    $region4: #{tpu_custom_call.1} parent=1 // loop_header_branch
      %16 = sbr.rel (%p14) target = $region8
    $region5: #{tpu_custom_call.1} parent=1 // loop_body
      %s18 = ssub.s32 %s13, 1
      %s19 = ssub.s32 %s13, 2
      %s20 = sadd.s32 %s13, 1
      %s21 = ssub.s32 %s13, %s20
      %p22 = scmp.eq.s32.totalorder %s21, 0
      %s24 = sadd.s32 %s23, 1
      %s25 = scalar_select %p22, %s23, %s24
      %p28 = pneg %p22
      %p29 = scmp.eq.s32.totalorder %s13, 1
      %p30 = por %p28, %p29
      %p31 = scmp.ne.s32.totalorder %s23, %s26
      %p32 = scmp.eq.s32.totalorder %s13, 0
      %p33 = por %p31, %p32
      %p34 = scmp.ne.s32.totalorder %s23, %s26
      %p35 = scmp.eq.s32.totalorder %s18, 1
      %p36 = por %p34, %p35
      %p37 = scmp.ne.s32.totalorder %s26, %s27
      %p38 = scmp.eq.s32.totalorder %s18, 0
      %p39 = por %p37, %p38
      %p40 = scmp.ne.s32.totalorder %s26, %s27
      %p41 = scmp.eq.s32.totalorder %s19, 1
      %p42 = por %p40, %p41
      %p44 = scmp.ne.s32.totalorder %s27, %s43
      %p45 = scmp.eq.s32.totalorder %s19, 0
      %p46 = por %p44, %p45
      %s48 = sadd.s32 %s47, 1
      %p51 = scmp.eq.s32.totalorder %s13, 1
      %p52 = scmp.ne.s32.totalorder %s47, %s49
      %p53 = scmp.eq.s32.totalorder %s13, 0
      %p54 = por %p52, %p53
      %p55 = scmp.ne.s32.totalorder %s47, %s49
      %p56 = scmp.eq.s32.totalorder %s18, 1
      %p57 = por %p55, %p56
      %p58 = scmp.ne.s32.totalorder %s49, %s50
      %p59 = scmp.eq.s32.totalorder %s18, 0
      %p60 = por %p58, %p59
      %p61 = scmp.ne.s32.totalorder %s49, %s50
      %p62 = scmp.eq.s32.totalorder %s19, 1
      %p63 = por %p61, %p62
      %p65 = scmp.ne.s32.totalorder %s50, %s64
      %p66 = scmp.eq.s32.totalorder %s19, 0
      %p67 = por %p65, %p66
      %s69 = sadd.s32 %s68, 1
      %p72 = scmp.eq.s32.totalorder %s13, 1
      %p73 = scmp.ne.s32.totalorder %s68, %s70
      %p74 = scmp.eq.s32.totalorder %s13, 0
      %p75 = por %p73, %p74
      %p76 = scmp.ne.s32.totalorder %s68, %s70
      %p77 = scmp.eq.s32.totalorder %s18, 1
      %p78 = por %p76, %p77
      %p79 = scmp.ne.s32.totalorder %s70, %s71
      %p80 = scmp.eq.s32.totalorder %s18, 0
      %p81 = por %p79, %p80
      %p82 = scmp.ne.s32.totalorder %s70, %s71
      %p83 = scmp.eq.s32.totalorder %s19, 1
      %p84 = por %p82, %p83
      %p86 = scmp.ne.s32.totalorder %s71, %s85
      %p87 = scmp.eq.s32.totalorder %s19, 0
      %p88 = por %p86, %p87
      %s90 = sadd.s32 %s89, 1
      %p93 = scmp.eq.s32.totalorder %s13, 1
      %p94 = scmp.ne.s32.totalorder %s89, %s91
      %p95 = scmp.eq.s32.totalorder %s13, 0
      %p96 = por %p94, %p95
      %p97 = scmp.ne.s32.totalorder %s89, %s91
      %p98 = scmp.eq.s32.totalorder %s18, 1
      %p99 = por %p97, %p98
      %p100 = scmp.ne.s32.totalorder %s91, %s92
      %p101 = scmp.eq.s32.totalorder %s18, 0
      %p102 = por %p100, %p101
      %p103 = scmp.ne.s32.totalorder %s91, %s92
      %p104 = scmp.eq.s32.totalorder %s19, 1
      %p105 = por %p103, %p104
      %p107 = scmp.ne.s32.totalorder %s92, %s106
      %p108 = scmp.eq.s32.totalorder %s19, 0
      %p109 = por %p107, %p108
      %s111 = sadd.s32 %s110, 1
      %p114 = scmp.eq.s32.totalorder %s13, 1
      %p115 = scmp.ne.s32.totalorder %s110, %s112
      %p116 = scmp.eq.s32.totalorder %s13, 0
      %p117 = por %p115, %p116
      %p118 = scmp.ne.s32.totalorder %s110, %s112
      %p119 = scmp.eq.s32.totalorder %s18, 1
      %p120 = por %p118, %p119
      %p121 = scmp.ne.s32.totalorder %s112, %s113
      %p122 = scmp.eq.s32.totalorder %s18, 0
      %p123 = por %p121, %p122
      %p124 = scmp.ne.s32.totalorder %s112, %s113
      %p125 = scmp.eq.s32.totalorder %s19, 1
      %p126 = por %p124, %p125
      %p128 = scmp.ne.s32.totalorder %s113, %s127
      %p129 = scmp.eq.s32.totalorder %s19, 0
      %p130 = por %p128, %p129
      %s131 = ssub.s32 %s13, %s20
      %p132 = scmp.eq.s32.totalorder %s131, 0
      %s134 = sadd.s32 %s133, 1
      %s135 = scalar_select %p132, %s133, %s134
      %p138 = pneg %p132
      %p139 = scmp.eq.s32.totalorder %s13, 1
      %p140 = por %p138, %p139
      %p141 = scmp.ne.s32.totalorder %s133, %s136
      %p142 = scmp.eq.s32.totalorder %s13, 0
      %p143 = por %p141, %p142
      %p144 = scmp.ne.s32.totalorder %s133, %s136
      %p145 = scmp.eq.s32.totalorder %s18, 1
      %p146 = por %p144, %p145
      %p147 = scmp.ne.s32.totalorder %s136, %s137
      %p148 = scmp.eq.s32.totalorder %s18, 0
      %p149 = por %p147, %p148
      %p150 = scmp.ne.s32.totalorder %s136, %s137
      %p151 = scmp.eq.s32.totalorder %s19, 1
      %p152 = por %p150, %p151
      %p154 = scmp.ne.s32.totalorder %s137, %s153
      %p155 = scmp.eq.s32.totalorder %s19, 0
      %p156 = por %p154, %p155
      %p157 = scmp.le.s32.totalorder 1, %s13
      %p158 = scmp.lt.s32.totalorder %s13, 3
      %p159 = pnand %p157, %p158
      %p160 = pneg %p159
      // Predicated region
      $region9: #{tpu_custom_call.1} parent=5 // pred_check
        _
      $region10: #{tpu_custom_call.1} parent=5 // pred_check_branch
        %162 = sbr.rel (%p159) target = $region12
      $region11: #{tpu_custom_call.1} parent=5 // pred_region
        %s163 = ssub.s32 %s13, 1
        // Predicated region
        $region13: #{tpu_custom_call.1} parent=11 // pred_check
          %p164 = pneg %p60
        $region14: #{tpu_custom_call.1} parent=11 // pred_check_branch
          %166 = sbr.rel (%p164) target = $region16
        $region15: #{tpu_custom_call.1} parent=11 // pred_region
          _
        $region16: #{tpu_custom_call.1} parent=11 // pred_fallthru
          _
        // Predicated region
        $region17: #{tpu_custom_call.1} parent=11 // pred_check
          %p167 = pneg %p81
        $region18: #{tpu_custom_call.1} parent=11 // pred_check_branch
          %169 = sbr.rel (%p167) target = $region20
        $region19: #{tpu_custom_call.1} parent=11 // pred_region
          _
        $region20: #{tpu_custom_call.1} parent=11 // pred_fallthru
          _
        // Predicated region
        $region21: #{tpu_custom_call.1} parent=11 // pred_check
          %p170 = pneg %p102
        $region22: #{tpu_custom_call.1} parent=11 // pred_check_branch
          %172 = sbr.rel (%p170) target = $region24
        $region23: #{tpu_custom_call.1} parent=11 // pred_region
          _
        $region24: #{tpu_custom_call.1} parent=11 // pred_fallthru
          _
        // Predicated region
        $region25: #{tpu_custom_call.1} parent=11 // pred_check
          %p173 = pneg %p123
        $region26: #{tpu_custom_call.1} parent=11 // pred_check_branch
          %175 = sbr.rel (%p173) target = $region28
        $region27: #{tpu_custom_call.1} parent=11 // pred_region
          _
        $region28: #{tpu_custom_call.1} parent=11 // pred_fallthru
          _
      $region12: #{tpu_custom_call.1} parent=5 // pred_fallthru
        _
      %p176 = scmp.lt.s32.totalorder %s13, 2
      // Predicated region
      $region29: #{tpu_custom_call.1} parent=5 // pred_check
        %p177 = pneg %p176
      $region30: #{tpu_custom_call.1} parent=5 // pred_check_branch
        %179 = sbr.rel (%p177) target = $region32
      $region31: #{tpu_custom_call.1} parent=5 // pred_region
        // Predicated region
        $region33: #{tpu_custom_call.1} parent=31 // pred_check
          %p180 = pneg %p33
        $region34: #{tpu_custom_call.1} parent=31 // pred_check_branch
          %182 = sbr.rel (%p180) target = $region36
        $region35: #{tpu_custom_call.1} parent=31 // pred_region
          %s183 = smul.u32 4, %s13
          %s184 = ssub.s32 7, %s183
          %p185 = scmp.lt.s32.totalorder %s184, 4
          %s186 = scalar_select %p185, %s184, 4
          %s187 = smul.u32 128, %s186
          %p188 = scmp.lt.s32.totalorder %s183, 6
          %s189 = scalar_select %p188, %s183, 6
          %s190 = smul.addr %s189, 8
          %s191 = scalar_lea.vmem %s0, %s190
          %s192 = smul.u32 4, %s13
          %s193 = ssub.s32 7, %s192
          %p194 = scmp.lt.s32.totalorder %s193, 4
          %s195 = scalar_select %p194, %s193, 4
          %s196 = smul.u32 128, %s195
        $region36: #{tpu_custom_call.1} parent=31 // pred_fallthru
          _
      $region32: #{tpu_custom_call.1} parent=5 // pred_fallthru
        _
      %p197 = scmp.le.s32.totalorder 1, %s13
      %p198 = scmp.lt.s32.totalorder %s13, 3
      %p199 = pnand %p197, %p198
      %p200 = pneg %p199
      // Predicated region
      $region37: #{tpu_custom_call.1} parent=5 // pred_check
        _
      $region38: #{tpu_custom_call.1} parent=5 // pred_check_branch
        %202 = sbr.rel (%p199) target = $region40
      $region39: #{tpu_custom_call.1} parent=5 // pred_region
        %s203 = ssub.s32 %s13, 1
        %s204 = smul.u32 4, %s18
        %s205 = ssub.s32 7, %s204
        %p206 = scmp.lt.s32.totalorder %s205, 4
        %s207 = scalar_select %p206, %s205, 4
        %s208 = smul.u32 128, %s207
        %p209 = scmp.lt.s32.totalorder %s204, 6
        %s210 = scalar_select %p209, %s204, 6
        %s211 = smul.addr %s210, 8
        %s212 = scalar_lea.vmem %s0, %s211
        %p213 = pneg %p39
        %p214 = pneg %p36
        %p215 = pneg %p60
        %p216 = pneg %p57
        %p217 = pneg %p81
        %p218 = pneg %p78
        %p219 = pneg %p102
        %p220 = pneg %p99
        %p221 = pneg %p123
        %p222 = pneg %p120
        %p223 = pneg %p149
        %p224 = pneg %p146
        %s225 = sand.u32 %s136, 1
        %s226 = sand.u32 %s136, 1
        %s227 = smul.addr %s226, 32
        %s228 = scalar_lea.vmem [#allocation3], %s227
        %s229 = smul.u32 4, %s18
        %s230 = ssub.s32 7, %s229
        %p231 = scmp.lt.s32.totalorder %s230, 4
        %s232 = scalar_select %p231, %s230, 4
        %s233 = smul.u32 128, %s232
        %p234 = scmp.lt.s32.totalorder %s229, 6
        %s235 = scalar_select %p234, %s229, 6
        %s236 = smul.addr %s235, 8
        %s237 = scalar_lea.vmem %s0, %s236
        %s238 = smul.u32 4, %s18
        %s239 = ssub.s32 7, %s238
        %p240 = scmp.lt.s32.totalorder %s239, 4
        %s241 = scalar_select %p240, %s239, 4
        %s242 = smul.u32 128, %s241
        %s243 = smul.u32 4, %s18
        %s244 = ssub.s32 7, %s243
        %p245 = scmp.lt.s32.totalorder %s244, 4
        %s246 = scalar_select %p245, %s244, 4
        %s247 = smul.u32 128, %s246
        %v248 = vld [vmem:[%s237] sm:$0xff]
        %v249 = vld [vmem:[%s237 + $0x8] sm:$0xff]
        %v250 = vld [vmem:[%s237 + $0x10] sm:$0xff]
        %v251 = vld [vmem:[%s237 + $0x18] sm:$0xff]
        %v252 = vld [vmem:[%s1] sm:$0xff]
        %v253 = vld [vmem:[%s1 + $0x8] sm:$0xff]
        %v254 = vld [vmem:[%s1 + $0x10] sm:$0xff]
        %v255 = vld [vmem:[%s1 + $0x18] sm:$0xff]
        %v256 = vld [vmem:[%s1 + $0x20] sm:$0xff]
        %v257 = vld [vmem:[%s1 + $0x28] sm:$0xff]
        %v258 = vld [vmem:[%s1 + $0x30] sm:$0xff]
        %v259 = vld [vmem:[%s1 + $0x38] sm:$0xff]
        %v260 = vld [vmem:[%s2] sm:$0x3]
        %v262 = vlaneseq
        %v263 = vshrl.u32 %v262, 7
        %v264 = vsub.s32 0, %v263
        %v265 = vrot.slane %v260, %v264
        %v266 = vlaneseq
        %v267 = vshrl.u32 %v266, 7
        %v268 = vsub.s32 1, %v267
        %v269 = vrot.slane %v260, %v268
        %vm272 = vcmask 261120
        %v274 = vsel %vm272, %v248, 0
        %v277 = vsel %vm272, %v249, 0
        %v280 = vsel %vm272, %v250, 0
        %v283 = vsel %vm272, %v251, 0
        %285 = vmatprep.subr.mxu0 %v253
        %286 = vmatpush1.msra.mxu0 %v252
        %287 = vmatprep.subr.mxu0 %v255
        %288 = vmatpush1.msra.mxu0 %v254
        %289 = vmatprep.subr.mxu0 %v257
        %290 = vmatpush1.msra.mxu0 %v256
        %291 = vmatprep.subr.mxu0 %v259
        %292 = vmatpush1.msra.mxu0 %v258
        %293 = vmatprep.subr.mxu0 0.0
        %294 = vmatpush1.msra.mxu0 0.0
        %295 = vmatprep.subr.mxu0 0.0
        %296 = vmatpush1.msra.mxu0 0.0
        %297 = vmatprep.subr.mxu0 0.0
        %298 = vmatpush1.msra.mxu0 0.0
        %299 = vmatprep.subr.mxu0 0.0
        %300 = vmatpush1.msra.mxu0 0.0
        %301 = vmatprep.subr.mxu0 0.0
        %302 = vmatpush1.msra.mxu0 0.0
        %303 = vmatprep.subr.mxu0 0.0
        %304 = vmatpush1.msra.mxu0 0.0
        %305 = vmatprep.subr.mxu0 0.0
        %306 = vmatpush1.msra.mxu0 0.0
        %307 = vmatprep.subr.mxu0 0.0
        %308 = vmatpush1.msra.mxu0 0.0
        %309 = vmatprep.subr.mxu0 0.0
        %310 = vmatpush1.msra.mxu0 0.0
        %311 = vmatprep.subr.mxu0 0.0
        %312 = vmatpush1.msra.mxu0 0.0
        %313 = vmatprep.subr.mxu0 0.0
        %314 = vmatpush1.msra.mxu0 0.0
        %315 = vmatprep.subr.mxu0 0.0
        %316 = vmatpush1.msra.mxu0 0.0
        %317 = vmatprep.subr.mxu0 0.0
        %318 = vmatpush1.msra.mxu0 0.0
        %319 = vmatprep.subr.mxu0 0.0
        %320 = vmatpush1.msra.mxu0 0.0
        %321 = vmatprep.subr.mxu0 0.0
        %322 = vmatpush1.msra.mxu0 0.0
        %323 = vmatprep.subr.mxu0 0.0
        %324 = vmatpush1.msra.mxu0 0.0
        %325 = vmatprep.subr.mxu0 0.0
        %326 = vmatpush1.msra.mxu0 0.0
        %327 = vmatprep.subr.mxu0 0.0
        %328 = vmatpush1.msra.mxu0 0.0
        %329 = vmatprep.subr.mxu0 0.0
        %330 = vmatpush1.msra.mxu0 0.0
        %331 = vmatprep.subr.mxu0 0.0
        %332 = vmatpush1.msra.mxu0 0.0
        %333 = vmatprep.subr.mxu0 0.0
        %334 = vmatpush1.msra.mxu0 0.0
        %335 = vmatprep.subr.mxu0 0.0
        %336 = vmatpush1.msra.mxu0 0.0
        %337 = vmatprep.subr.mxu0 0.0
        %338 = vmatpush1.msra.mxu0 0.0
        %339 = vmatprep.subr.mxu0 0.0
        %340 = vmatpush1.msra.mxu0 0.0
        %341 = vmatprep.subr.mxu0 0.0
        %342 = vmatpush1.msra.mxu0 0.0
        %343 = vmatprep.subr.mxu0 0.0
        %344 = vmatpush1.msra.mxu0 0.0
        %345 = vmatprep.subr.mxu0 0.0
        %346 = vmatpush1.msra.mxu0 0.0
        %347 = vmatprep.subr.mxu0 0.0
        %348 = vmatpush1.msra.mxu0 0.0
        %349 = vmatprep.mubr.f32.mxu0 0.0
        %350 = vmatmul.mubr.f32.gmra.mrb[0].mxu0 %v274
        %v351 = vpop.f32.mrb[0].mxu0
        %v352 = vadd.f32 %v265, %v351
        %v353 = vpop.f32.mrb[0].mxu0
        %v354 = vadd.f32 %v269, %v353
        %355 = vmatprep.mubr.f32.mxu0 0.0
        %356 = vmatmul.mubr.f32.gmra.mrb[0].mxu0 %v277
        %v357 = vpop.f32.mrb[0].mxu0
        %v358 = vadd.f32 %v265, %v357
        %v359 = vpop.f32.mrb[0].mxu0
        %v360 = vadd.f32 %v269, %v359
        %361 = vmatprep.mubr.f32.mxu0 0.0
        %362 = vmatmul.mubr.f32.gmra.mrb[0].mxu0 %v280
        %v363 = vpop.f32.mrb[0].mxu0
        %v364 = vadd.f32 %v265, %v363
        %v365 = vpop.f32.mrb[0].mxu0
        %v366 = vadd.f32 %v269, %v365
        %367 = vmatprep.mubr.f32.mxu0 0.0
        %368 = vmatmul.mubr.f32.gmra.mrb[0].mxu0 %v283
        %v369 = vpop.f32.mrb[0].mxu0
        %v370 = vadd.f32 %v265, %v369
        %v371 = vpop.f32.mrb[0].mxu0
        %v372 = vadd.f32 %v269, %v371
        %373 = vdwg.mxu0
        %v374 = vtanh.pop %v352
        %v375 = vtanh.pop %v358
        %v376 = vtanh.pop %v364
        %v377 = vtanh.pop %v370
        %v378 = vxor.u32 %v354, 2147483648
        %v379 = vxor.u32 %v360, 2147483648
        %v380 = vxor.u32 %v366, 2147483648
        %v381 = vxor.u32 %v372, 2147483648
        %v382 = vmul.f32 %v378, 1.442695
        %v383 = vpow.pop %v382
        %v384 = vmul.f32 %v379, 1.442695
        %v385 = vpow.pop %v384
        %v386 = vmul.f32 %v380, 1.442695
        %v387 = vpow.pop %v386
        %v388 = vmul.f32 %v381, 1.442695
        %v389 = vpow.pop %v388
        %v390 = vadd.f32 %v383, 1.0
        %v391 = vadd.f32 %v385, 1.0
        %v392 = vadd.f32 %v387, 1.0
        %v393 = vadd.f32 %v389, 1.0
        %v394 = vrcp.pop %v390
        %v395 = vmul.f32 1.0, %v394
        %v396 = vrcp.pop %v391
        %v397 = vmul.f32 1.0, %v396
        %v398 = vrcp.pop %v392
        %v399 = vmul.f32 1.0, %v398
        %v400 = vrcp.pop %v393
        %v401 = vmul.f32 1.0, %v400
        %v402 = vmul.f32 %v374, %v395
        %v403 = vmul.f32 %v375, %v397
        %v404 = vmul.f32 %v376, %v399
        %v405 = vmul.f32 %v377, %v401
        %v406 = vld [vmem:[%s3] sm:$0xff]
        %v407 = vld [vmem:[%s3 + $0x8] sm:$0xff]
        %v408 = vld [vmem:[%s3 + $0x10] sm:$0xff]
        %v409 = vld [vmem:[%s3 + $0x18] sm:$0xff]
        %v410 = vld [vmem:[%s3 + $0x20] sm:$0xff]
        %v411 = vld [vmem:[%s3 + $0x28] sm:$0xff]
        %v412 = vld [vmem:[%s3 + $0x30] sm:$0xff]
        %v413 = vld [vmem:[%s3 + $0x38] sm:$0xff]
        %v414 = vld [vmem:[%s3 + $0x40] sm:$0xff]
        %v415 = vld [vmem:[%s3 + $0x48] sm:$0xff]
        %v416 = vld [vmem:[%s3 + $0x50] sm:$0xff]
        %v417 = vld [vmem:[%s3 + $0x58] sm:$0xff]
        %v418 = vld [vmem:[%s3 + $0x60] sm:$0xff]
        %v419 = vld [vmem:[%s3 + $0x68] sm:$0xff]
        %v420 = vld [vmem:[%s3 + $0x70] sm:$0xff]
        %v421 = vld [vmem:[%s3 + $0x78] sm:$0xff]
        %v422 = vld [vmem:[#allocation2] sm:$0x1]
        %v424 = vlaneseq
        %v425 = vshrl.u32 %v424, 7
        %v426 = vsub.s32 0, %v425
        %v427 = vrot.slane %v422, %v426
        %429 = vmatprep.subr.mxu0 0.0
        %430 = vmatpush1.msra.mxu0 %v406
        %431 = vmatprep.subr.mxu0 0.0
        %432 = vmatpush1.msra.mxu0 %v407
        %433 = vmatprep.subr.mxu0 0.0
        %434 = vmatpush1.msra.mxu0 %v408
        %435 = vmatprep.subr.mxu0 0.0
        %436 = vmatpush1.msra.mxu0 %v409
        %437 = vmatprep.subr.mxu0 0.0
        %438 = vmatpush1.msra.mxu0 %v410
        %439 = vmatprep.subr.mxu0 0.0
        %440 = vmatpush1.msra.mxu0 %v411
        %441 = vmatprep.subr.mxu0 0.0
        %442 = vmatpush1.msra.mxu0 %v412
        %443 = vmatprep.subr.mxu0 0.0
        %444 = vmatpush1.msra.mxu0 %v413
        %445 = vmatprep.subr.mxu0 0.0
        %446 = vmatpush1.msra.mxu0 %v414
        %447 = vmatprep.subr.mxu0 0.0
        %448 = vmatpush1.msra.mxu0 %v415
        %449 = vmatprep.subr.mxu0 0.0
        %450 = vmatpush1.msra.mxu0 %v416
        %451 = vmatprep.subr.mxu0 0.0
        %452 = vmatpush1.msra.mxu0 %v417
        %453 = vmatprep.subr.mxu0 0.0
        %454 = vmatpush1.msra.mxu0 %v418
        %455 = vmatprep.subr.mxu0 0.0
        %456 = vmatpush1.msra.mxu0 %v419
        %457 = vmatprep.subr.mxu0 0.0
        %458 = vmatpush1.msra.mxu0 %v420
        %459 = vmatprep.subr.mxu0 0.0
        %460 = vmatpush1.msra.mxu0 %v421
        %461 = vmatprep.subr.mxu0 0.0
        %462 = vmatpush1.msra.mxu0 0.0
        %463 = vmatprep.subr.mxu0 0.0
        %464 = vmatpush1.msra.mxu0 0.0
        %465 = vmatprep.subr.mxu0 0.0
        %466 = vmatpush1.msra.mxu0 0.0
        %467 = vmatprep.subr.mxu0 0.0
        %468 = vmatpush1.msra.mxu0 0.0
        %469 = vmatprep.subr.mxu0 0.0
        %470 = vmatpush1.msra.mxu0 0.0
        %471 = vmatprep.subr.mxu0 0.0
        %472 = vmatpush1.msra.mxu0 0.0
        %473 = vmatprep.subr.mxu0 0.0
        %474 = vmatpush1.msra.mxu0 0.0
        %475 = vmatprep.subr.mxu0 0.0
        %476 = vmatpush1.msra.mxu0 0.0
        %477 = vmatprep.subr.mxu0 0.0
        %478 = vmatpush1.msra.mxu0 0.0
        %479 = vmatprep.subr.mxu0 0.0
        %480 = vmatpush1.msra.mxu0 0.0
        %481 = vmatprep.subr.mxu0 0.0
        %482 = vmatpush1.msra.mxu0 0.0
        %483 = vmatprep.subr.mxu0 0.0
        %484 = vmatpush1.msra.mxu0 0.0
        %485 = vmatprep.subr.mxu0 0.0
        %486 = vmatpush1.msra.mxu0 0.0
        %487 = vmatprep.subr.mxu0 0.0
        %488 = vmatpush1.msra.mxu0 0.0
        %489 = vmatprep.subr.mxu0 0.0
        %490 = vmatpush1.msra.mxu0 0.0
        %491 = vmatprep.subr.mxu0 0.0
        %492 = vmatpush1.msra.mxu0 0.0
        %493 = vmatprep.mubr.f32.mxu0 0.0
        %494 = vmatmul.mubr.f32.gmra.mrb[0].mxu0 %v402
        %v495 = vpop.f32.mrb[0].mxu0
        %v496 = vadd.f32 %v427, %v495
        %v497 = vpop.f32.mrb[0].mxu0
        %498 = vmatprep.mubr.f32.mxu0 0.0
        %499 = vmatmul.mubr.f32.gmra.mrb[0].mxu0 %v403
        %v500 = vpop.f32.mrb[0].mxu0
        %v501 = vadd.f32 %v427, %v500
        %v502 = vpop.f32.mrb[0].mxu0
        %503 = vmatprep.mubr.f32.mxu0 0.0
        %504 = vmatmul.mubr.f32.gmra.mrb[0].mxu0 %v404
        %v505 = vpop.f32.mrb[0].mxu0
        %v506 = vadd.f32 %v427, %v505
        %v507 = vpop.f32.mrb[0].mxu0
        %508 = vmatprep.mubr.f32.mxu0 0.0
        %509 = vmatmul.mubr.f32.gmra.mrb[0].mxu0 %v405
        %v510 = vpop.f32.mrb[0].mxu0
        %v511 = vadd.f32 %v427, %v510
        %v512 = vpop.f32.mrb[0].mxu0
        %513 = vdwg.mxu0
        %vm514 = vcmask 7168
        %515 = vst.msk [vmem:[%s228] sm:$0xff] %vm514, %v496
        %516 = vst.msk [vmem:[%s228 + $0x8] sm:$0xff] %vm514, %v501
        %517 = vst.msk [vmem:[%s228 + $0x10] sm:$0xff] %vm514, %v506
        %518 = vst.msk [vmem:[%s228 + $0x18] sm:$0xff] %vm514, %v511
        %s519 = sand.u32 %s136, 1
        %s520 = sand.u32 %s136, 1
        %s521 = smul.addr %s520, 32
        %s522 = scalar_lea.vmem [#allocation3], %s521
        // Predicated region
        $region41: #{tpu_custom_call.1} parent=39 // pred_check
          %p523 = pneg %p146
        $region42: #{tpu_custom_call.1} parent=39 // pred_check_branch
          %525 = sbr.rel (%p523) target = $region44
        $region43: #{tpu_custom_call.1} parent=39 // pred_region
          %s526 = smul.u32 4, %s18
          %s527 = ssub.s32 7, %s526
          %p528 = scmp.lt.s32.totalorder %s527, 4
          %s529 = scalar_select %p528, %s527, 4
          %s530 = smul.u32 128, %s529
          %p531 = scmp.ne.s32.totalorder 0, %s530
          %s532 = smul.addr %s526, 8
          %s533 = scalar_lea.vmem %s5, %s532
          // Predicated region
          $region45: #{tpu_custom_call.1} parent=43 // pred_check
            %p534 = pneg %p531
          $region46: #{tpu_custom_call.1} parent=43 // pred_check_branch
            %536 = sbr.rel (%p534) target = $region48
          $region47: #{tpu_custom_call.1} parent=43 // pred_region
            // Predicated region
            $region49: #{tpu_custom_call.1} parent=47 // pred_check
              _
            $region50: #{tpu_custom_call.1} parent=47 // pred_check_branch
              %538 = sbr.rel (0) target = $region52
            $region51: #{tpu_custom_call.1} parent=47 // pred_region
              // Predicated region
              $region71: #{tpu_custom_call.1} parent=51 // pred_check
                _
              $region72: #{tpu_custom_call.1} parent=51 // pred_check_branch
                %593 = sbr.rel (0) target = $region74
              $region73: #{tpu_custom_call.1} parent=51 // pred_region
                %s594 = sshrl.u32 %s529, 2
                // While loop
                $region75: #{tpu_custom_call.1} parent=73 // loop_pre_header
                  _
                $region76: #{tpu_custom_call.1} parent=73 // loop_header
                  %s596 = sphi 0, %s598
                  %p597 = scmp.ge.s32.totalorder %s596, %s594
                  %s601 = sphi 0, %s614
                  %s602 = sphi %s522, %s617
                  %s603 = sphi %s533, %s618
                $region77: #{tpu_custom_call.1} parent=73 // loop_header_branch
                  %600 = sbr.rel (%p597) target = $region81
                $region78: #{tpu_custom_call.1} parent=73 // loop_body
                  %v604 = vld [vmem:[%s602] sm:$0xff]
                  %605 = vst [vmem:[%s603] sm:$0xff] %v604
                  %v606 = vld [vmem:[%s602 + $0x8] sm:$0xff]
                  %607 = vst [vmem:[%s603 + $0x8] sm:$0xff] %v606
                  %v608 = vld [vmem:[%s602 + $0x10] sm:$0xff]
                  %609 = vst [vmem:[%s603 + $0x10] sm:$0xff] %v608
                  %v610 = vld [vmem:[%s602 + $0x18] sm:$0xff]
                  %611 = vst [vmem:[%s603 + $0x18] sm:$0xff] %v610
                  %s612 = sadd.s32 1, %s601
                  %p613 = scmp.ge.s32.totalorder %s612, %s594
                  %s614 = scalar_select %p613, 0, %s612
                  %s615 = smul.u32 %s614, 32
                  %s616 = smul.u32 %s614, 32
                  %s617 = scalar_lea.vmem %s522, %s615 [#allocation3]
                  %s618 = scalar_lea.vmem %s533, %s616
                $region79: #{tpu_custom_call.1} parent=73 // loop_footer
                  %s598 = sadd.s32 %s596, 1
                $region80: #{tpu_custom_call.1} parent=73 // loop_footer_branch
                  %595 = sbr.rel target = $region76
                $region81: #{tpu_custom_call.1} parent=73 // loop_exit
                  _
                %s619 = sshrl.u32 %s529, 2
                %s620 = sand.u32 %s529, 3
                %s621 = smul.u32 %s619, 4
                %s622 = smul.u32 8, %s621
                %s623 = scalar_lea.vmem %s522, %s622 [#allocation3]
                %s624 = smul.u32 8, %s621
                %s625 = scalar_lea.vmem %s533, %s624
                // While loop
                $region82: #{tpu_custom_call.1} parent=73 // loop_pre_header
                  _
                $region83: #{tpu_custom_call.1} parent=73 // loop_header
                  %s627 = sphi 0, %s629
                  %p628 = scmp.ge.s32.totalorder %s627, %s620
                  %s632 = sphi 0, %s639
                  %s633 = sphi %s623, %s642
                  %s634 = sphi %s625, %s643
                $region84: #{tpu_custom_call.1} parent=73 // loop_header_branch
                  %631 = sbr.rel (%p628) target = $region88
                $region85: #{tpu_custom_call.1} parent=73 // loop_body
                  %v635 = vld [vmem:[%s633] sm:$0xff]
                  %636 = vst [vmem:[%s634] sm:$0xff] %v635
                  %s637 = sadd.s32 1, %s632
                  %p638 = scmp.ge.s32.totalorder %s637, %s620
                  %s639 = scalar_select %p638, 0, %s637
                  %s640 = smul.u32 %s639, 8
                  %s641 = smul.u32 %s639, 8
                  %s642 = scalar_lea.vmem %s623, %s640 [#allocation3]
                  %s643 = scalar_lea.vmem %s625, %s641
                $region86: #{tpu_custom_call.1} parent=73 // loop_footer
                  %s629 = sadd.s32 %s627, 1
                $region87: #{tpu_custom_call.1} parent=73 // loop_footer_branch
                  %626 = sbr.rel target = $region83
                $region88: #{tpu_custom_call.1} parent=73 // loop_exit
                  _
              $region74: #{tpu_custom_call.1} parent=51 // pred_fallthru
                _
              // Predicated region
              $region89: #{tpu_custom_call.1} parent=51 // pred_check
                _
              $region90: #{tpu_custom_call.1} parent=51 // pred_check_branch
                %645 = sbr.rel target = $region92
              $region91: #{tpu_custom_call.1} parent=51 // pred_region
                _
              $region92: #{tpu_custom_call.1} parent=51 // pred_fallthru
                _
            $region52: #{tpu_custom_call.1} parent=47 // pred_fallthru
              _
            // Predicated region
            $region53: #{tpu_custom_call.1} parent=47 // pred_check
              _
            $region54: #{tpu_custom_call.1} parent=47 // pred_check_branch
              %540 = sbr.rel target = $region56
            $region55: #{tpu_custom_call.1} parent=47 // pred_region
              %s542 = sshrl.u32 %s529, 2
              // While loop
              $region57: #{tpu_custom_call.1} parent=55 // loop_pre_header
                _
              $region58: #{tpu_custom_call.1} parent=55 // loop_header
                %s544 = sphi 0, %s546
                %p545 = scmp.ge.s32.totalorder %s544, %s542
                %s549 = sphi 0, %s562
                %s550 = sphi %s522, %s565
                %s551 = sphi %s533, %s566
              $region59: #{tpu_custom_call.1} parent=55 // loop_header_branch
                %548 = sbr.rel (%p545) target = $region63
              $region60: #{tpu_custom_call.1} parent=55 // loop_body
                %v552 = vld [vmem:[%s550] sm:$0xff]
                %553 = vst [vmem:[%s551] sm:$0xff] %v552
                %v554 = vld [vmem:[%s550 + $0x8] sm:$0xff]
                %555 = vst [vmem:[%s551 + $0x8] sm:$0xff] %v554
                %v556 = vld [vmem:[%s550 + $0x10] sm:$0xff]
                %557 = vst [vmem:[%s551 + $0x10] sm:$0xff] %v556
                %v558 = vld [vmem:[%s550 + $0x18] sm:$0xff]
                %559 = vst [vmem:[%s551 + $0x18] sm:$0xff] %v558
                %s560 = sadd.s32 1, %s549
                %p561 = scmp.ge.s32.totalorder %s560, %s542
                %s562 = scalar_select %p561, 0, %s560
                %s563 = smul.u32 %s562, 32
                %s564 = smul.u32 %s562, 32
                %s565 = scalar_lea.vmem %s522, %s563 [#allocation3]
                %s566 = scalar_lea.vmem %s533, %s564
              $region61: #{tpu_custom_call.1} parent=55 // loop_footer
                %s546 = sadd.s32 %s544, 1
              $region62: #{tpu_custom_call.1} parent=55 // loop_footer_branch
                %543 = sbr.rel target = $region58
              $region63: #{tpu_custom_call.1} parent=55 // loop_exit
                _
              %s567 = sshrl.u32 %s529, 2
              %s568 = sand.u32 %s529, 3
              %s569 = smul.u32 %s567, 4
              %s570 = smul.u32 8, %s569
              %s571 = scalar_lea.vmem %s522, %s570 [#allocation3]
              %s572 = smul.u32 8, %s569
              %s573 = scalar_lea.vmem %s533, %s572
              // While loop
              $region64: #{tpu_custom_call.1} parent=55 // loop_pre_header
                _
              $region65: #{tpu_custom_call.1} parent=55 // loop_header
                %s575 = sphi 0, %s577
                %p576 = scmp.ge.s32.totalorder %s575, %s568
                %s580 = sphi 0, %s587
                %s581 = sphi %s571, %s590
                %s582 = sphi %s573, %s591
              $region66: #{tpu_custom_call.1} parent=55 // loop_header_branch
                %579 = sbr.rel (%p576) target = $region70
              $region67: #{tpu_custom_call.1} parent=55 // loop_body
                %v583 = vld [vmem:[%s581] sm:$0xff]
                %584 = vst [vmem:[%s582] sm:$0xff] %v583
                %s585 = sadd.s32 1, %s580
                %p586 = scmp.ge.s32.totalorder %s585, %s568
                %s587 = scalar_select %p586, 0, %s585
                %s588 = smul.u32 %s587, 8
                %s589 = smul.u32 %s587, 8
                %s590 = scalar_lea.vmem %s571, %s588 [#allocation3]
                %s591 = scalar_lea.vmem %s573, %s589
              $region68: #{tpu_custom_call.1} parent=55 // loop_footer
                %s577 = sadd.s32 %s575, 1
              $region69: #{tpu_custom_call.1} parent=55 // loop_footer_branch
                %574 = sbr.rel target = $region65
              $region70: #{tpu_custom_call.1} parent=55 // loop_exit
                _
            $region56: #{tpu_custom_call.1} parent=47 // pred_fallthru
              _
          $region48: #{tpu_custom_call.1} parent=43 // pred_fallthru
            _
          %646 = vnop
        $region44: #{tpu_custom_call.1} parent=39 // pred_fallthru
          _
      $region40: #{tpu_custom_call.1} parent=5 // pred_fallthru
        _
      %p647 = scmp.le.s32.totalorder 2, %s13
      // Predicated region
      $region93: #{tpu_custom_call.1} parent=5 // pred_check
        %p648 = pneg %p647
      $region94: #{tpu_custom_call.1} parent=5 // pred_check_branch
        %650 = sbr.rel (%p648) target = $region96
      $region95: #{tpu_custom_call.1} parent=5 // pred_region
        %s651 = ssub.s32 %s13, 2
        // Predicated region
        $region97: #{tpu_custom_call.1} parent=95 // pred_check
          %p652 = pneg %p152
        $region98: #{tpu_custom_call.1} parent=95 // pred_check_branch
          %654 = sbr.rel (%p652) target = $region100
        $region99: #{tpu_custom_call.1} parent=95 // pred_region
          %s655 = sand.u32 %s137, 1
          %s656 = sand.u32 %s137, 1
          %s657 = smul.addr %s656, 32
          %s658 = scalar_lea.vmem [#allocation3], %s657
        $region100: #{tpu_custom_call.1} parent=95 // pred_fallthru
          _
      $region96: #{tpu_custom_call.1} parent=5 // pred_fallthru
        _
    $region6: #{tpu_custom_call.1} parent=1 // loop_footer
      %s17 = sadd.s32 1, %s13
    $region7: #{tpu_custom_call.1} parent=1 // loop_footer_branch
      %12 = sbr.rel target = $region3
    $region8: #{tpu_custom_call.1} parent=1 // loop_exit
      _

</llo_original>
